<compile_context>
chip_gen: v6e
topology: v6e:2x2x1
jax: 0.10.0
libtpu: 0.0.40
codegen_flags: <defaults>
</compile_context>

<pallas_src>
import functools

import jax
import jax.numpy as jnp
import numpy as np
from jax import lax
from jax.experimental import pallas as pl
from jax.experimental.pallas import tpu as pltpu

EPS = 1e-5
LANE = 128


def _pad_to(n, m):
    return ((n + m - 1) // m) * m


# ------------------------------ Pallas kernels ------------------------------

def _bn_stats_kernel(x_ref, st_ref):
    """Per-grid-step partial BN statistics of the phase-relaid input block.

    x_ref : (NB, S2, Hq, Wq, C) f32   (spatial/phase/channel zero padding
                                       contributes 0 to both sums)
    st_ref: (1, 2, C) f32  [row0 = sum, row1 = sumsq]
    """
    x = x_ref[...]
    s = x
    q = x * x
    for _ in range(x.ndim - 2):          # reduce all leading axes
        s = jnp.sum(s, axis=0)
        q = jnp.sum(q, axis=0)
    st_ref[0, 0:1, :] = jnp.sum(s, axis=0, keepdims=True)
    st_ref[0, 1:2, :] = jnp.sum(q, axis=0, keepdims=True)


def _tap_matmuls(h_ref, w_ref, *, NB, Ho, Wo, stride):
    """3x3 conv as 9 lane-dense MXU matmuls over a pre-activated bf16 scratch.

    h_ref : (NB, stride*stride, Hq, Wq, C) bf16 VMEM scratch, halo already zero.
    w_ref : (9, C, P) bf16, tap index = kh*3 + kw.
    Returns (acc f32 (NB*Ho*Wo, P), centre-tap bf16 (NB*Ho*Wo, C)).
    """
    s = stride
    C = h_ref.shape[-1]
    P = w_ref.shape[-1]
    M = NB * Ho * Wo
    acc = jnp.zeros((M, P), jnp.float32)
    center = None
    for kh in range(3):
        for kw in range(3):
            phase = (kh % s) * s + (kw % s)
            slab = h_ref[:, phase, pl.ds(kh // s, Ho), pl.ds(kw // s, Wo), :]
            slab = slab.reshape(M, C)
            if kh == 1 and kw == 1:
                center = slab
            acc = acc + jnp.dot(slab, w_ref[kh * 3 + kw],
                                preferred_element_type=jnp.float32)
    return acc, center


def _conv1_kernel(x_ref, scale_ref, shift_ref, w_ref, wsc_ref,
                  out_ref, sc_ref, st_ref, h_scr,
                  *, stride, Hp, Wp, Ho, Wo, conv_shortcut):
    """bn1+relu -> conv1(3x3,stride) fused with the 1x1 shortcut + bn2 partial stats."""
    s = stride
    NB = x_ref.shape[0]
    C = x_ref.shape[-1]
    P = w_ref.shape[-1]

    # ---- hoisted pre-pass: BN + ReLU + halo zeroing + bf16 cast, done ONCE ----
    x = x_ref[...]
    scale = scale_ref[...].reshape(1, 1, 1, 1, C)
    shift = shift_ref[...].reshape(1, 1, 1, 1, C)
    h = jnp.maximum(x * scale + shift, 0.0)

    # zero positions that fall on the conv zero-padding halo / phase padding
    p_idx = lax.broadcasted_iota(jnp.int32, x.shape, 1)
    i_idx = lax.broadcasted_iota(jnp.int32, x.shape, 2)
    j_idx = lax.broadcasted_iota(jnp.int32, x.shape, 3)
    r = i_idx * s + p_idx // s
    c = j_idx * s + p_idx % s
    halo = (r == 0) | (r >= Hp - 1) | (c == 0) | (c >= Wp - 1)
    h_scr[...] = jnp.where(halo, 0.0, h).astype(jnp.bfloat16)

    # ---- 9 taps: slice + MXU matmul only ----
    acc, center = _tap_matmuls(h_scr, w_ref, NB=NB, Ho=Ho, Wo=Wo, stride=s)

    # conv1 output: unpadded, bf16 (conv2 rebuilds the halo in its own VMEM)
    out_ref[...] = acc.reshape(NB, Ho, Wo, P).astype(out_ref.dtype)

    # fused shortcut: 1x1 strided conv (or identity) on the pre-activated centre tap
    if conv_shortcut:
        sc = jnp.dot(center, wsc_ref[...], preferred_element_type=jnp.float32)
        sc_ref[...] = sc.reshape(NB, Ho * Wo, P).astype(sc_ref.dtype)
    else:
        sc_ref[...] = center.reshape(NB, Ho * Wo, C).astype(sc_ref.dtype)

    # bn2 partial statistics from the f32 accumulator (reduced in the wrapper)
    st_ref[0, 0:1, :] = jnp.sum(acc, axis=0, keepdims=True)
    st_ref[0, 1:2, :] = jnp.sum(acc * acc, axis=0, keepdims=True)


def _conv2_kernel(x_ref, scale_ref, shift_ref, w_ref, res_ref, out_ref, h_scr,
                  *, Ho, Wo):
    """bn2+relu -> conv2(3x3, stride 1) fused with the residual add.

    x_ref : (NB, Ho, Wo, P) bf16  (unpadded conv1 output)
    h_scr : (NB, 1, Ho+2, Wo+2, P) bf16 scratch; halo ring zeroed each step.
    """
    NB = x_ref.shape[0]
    P = w_ref.shape[-1]

    # zero only the 1-wide halo ring (4 thin slabs), not the whole buffer
    zrow = jnp.zeros((NB, 1, 1, Wo + 2, P), jnp.bfloat16)
    zcol = jnp.zeros((NB, 1, Ho + 2, 1, P), jnp.bfloat16)
    h_scr[:, :, 0:1, :, :] = zrow
    h_scr[:, :, Ho + 1:Ho + 2, :, :] = zrow
    h_scr[:, :, :, 0:1, :] = zcol
    h_scr[:, :, :, Wo + 1:Wo + 2, :] = zcol

    # hoisted pre-pass: BN + ReLU + bf16 cast once, written into the padded scratch
    scale = scale_ref[...].reshape(1, 1, 1, P)
    shift = shift_ref[...].reshape(1, 1, 1, P)
    h = jnp.maximum(x_ref[...].astype(jnp.float32) * scale + shift, 0.0)
    h_scr[:, :, 1:1 + Ho, 1:1 + Wo, :] = h.astype(jnp.bfloat16).reshape(
        NB, 1, Ho, Wo, P)

    acc, _ = _tap_matmuls(h_scr, w_ref, NB=NB, Ho=Ho, Wo=Wo, stride=1)
    res = res_ref[...].astype(jnp.float32).reshape(NB * Ho * Wo, P)
    out_ref[...] = (acc + res).reshape(NB, Ho, Wo, P).astype(out_ref.dtype)


# ------------------------------ host-side glue ------------------------------

def _bn_scale_shift(stats, gamma, beta, count):
    s = jnp.sum(stats[:, 0, :], axis=0)
    sq = jnp.sum(stats[:, 1, :], axis=0)
    mean = s / count
    var = jnp.maximum(sq / count - mean * mean, 0.0)   # clamp: cancellation guard
    scale = gamma * lax.rsqrt(var + EPS)
    shift = beta - mean * scale
    return scale[None, :], shift[None, :]


def _prep_w3x3(w_oihw, cpad, ppad):
    """torch conv weight [P,Cin,3,3] -> (9, cpad, ppad) bf16, tap = kh*3+kw."""
    p, cin, kh, kw = w_oihw.shape
    wm = jnp.transpose(w_oihw, (2, 3, 1, 0)).reshape(kh * kw, cin, p)
    wm = jnp.pad(wm, ((0, 0), (0, cpad - cin), (0, ppad - p)))
    return wm.astype(jnp.bfloat16)


def _prep_w1x1(w_oihw, cpad, ppad):
    p, cin = w_oihw.shape[:2]
    wm = jnp.transpose(w_oihw.reshape(p, cin), (1, 0))
    wm = jnp.pad(wm, ((0, cpad - cin), (0, ppad - p)))
    return wm.astype(jnp.bfloat16)


def preact_block_forward(x_nchw, params, stride):
    x = jnp.transpose(x_nchw, (0, 2, 3, 1)).astype(jnp.float32)   # NHWC
    N, H, W, Cin = x.shape
    planes = params["conv1_w"].shape[0]
    s = stride
    Cp = _pad_to(Cin, LANE)
    Pp = _pad_to(planes, LANE)
    conv_shortcut = (s != 1) or (Cin != planes)

    Hp, Wp = H + 2, W + 2
    Ho = (Hp - 3) // s + 1
    Wo = (Wp - 3) // s + 1

    # batch tile: fold images into the matmul M dim so M = NB*Ho*Wo >= 128
    NB = min(N, max(1, -(-LANE // (Ho * Wo))))
    while N % NB:
        NB -= 1
    G = N // NB

    # spatial halo (zero pad = 1) + channel padding to 128 + space-to-phase
    # relayout so every in-kernel tap read is a contiguous (Ho, Wo, C) slice.
    # (no standalone padded copy is written to HBM; only xq is materialized)
    xp = jnp.pad(x, ((0, 0), (1, 1), (1, 1), (0, Cp - Cin)))
    if s == 1:
        xq = xp[:, None]                                   # (N,1,Hp,Wp,Cp)
        Hq, Wq = Hp, Wp
    else:
        Hq, Wq = -(-Hp // s), -(-Wp // s)
        xpp = jnp.pad(xp, ((0, 0), (0, Hq * s - Hp), (0, Wq * s - Wp), (0, 0)))
        xq = xpp.reshape(N, Hq, s, Wq, s, Cp).transpose(0, 2, 4, 1, 3, 5)
        xq = xq.reshape(N, s * s, Hq, Wq, Cp)
    S2 = s * s

    cparams = pltpu.CompilerParams(dimension_semantics=("parallel",),
                                   vmem_limit_bytes=64 * 1024 * 1024)

    # ---- bn1 statistics: per-grid-step partials over the SAME xq buffer ----
    st1 = pl.pallas_call(
        _bn_stats_kernel,
        out_shape=jax.ShapeDtypeStruct((G, 2, Cp), jnp.float32),
        grid_spec=pltpu.PrefetchScalarGridSpec(
            num_scalar_prefetch=0, grid=(G,),
            in_specs=[pl.BlockSpec((NB, S2, Hq, Wq, Cp),
                                   lambda g: (g, 0, 0, 0, 0))],
            out_specs=pl.BlockSpec((1, 2, Cp), lambda g: (g, 0, 0))),
        compiler_params=cparams,
    )(xq)

    g1 = jnp.pad(params["bn1_gamma"], (0, Cp - Cin)).astype(jnp.float32)
    b1 = jnp.pad(params["bn1_beta"], (0, Cp - Cin)).astype(jnp.float32)
    scale1, shift1 = _bn_scale_shift(st1, g1, b1, N * H * W)

    w1 = _prep_w3x3(params["conv1_w"], Cp, Pp)
    w2 = _prep_w3x3(params["conv2_w"], Pp, Pp)
    if conv_shortcut:
        wsc = _prep_w1x1(params["sc_w"], Cp, Pp)
    else:
        wsc = jnp.zeros((Cp, Pp), jnp.bfloat16)            # unused

    # ---- fused bn1+relu -> conv1(3x3,stride) + shortcut + bn2 partial stats ----
    kernel1 = functools.partial(_conv1_kernel, stride=s, Hp=Hp, Wp=Wp,
                                Ho=Ho, Wo=Wo, conv_shortcut=conv_shortcut)
    out1, sc2d, st2 = pl.pallas_call(
        kernel1,
        out_shape=(jax.ShapeDtypeStruct((N, Ho, Wo, Pp), jnp.bfloat16),
                   jax.ShapeDtypeStruct((N, Ho * Wo, Pp), jnp.bfloat16),
                   jax.ShapeDtypeStruct((G, 2, Pp), jnp.float32)),
        grid_spec=pltpu.PrefetchScalarGridSpec(
            num_scalar_prefetch=0, grid=(G,),
            in_specs=[pl.BlockSpec((NB, S2, Hq, Wq, Cp),
                                   lambda g: (g, 0, 0, 0, 0)),
                      pl.BlockSpec((1, Cp), lambda g: (0, 0)),
                      pl.BlockSpec((1, Cp), lambda g: (0, 0)),
                      pl.BlockSpec((9, Cp, Pp), lambda g: (0, 0, 0)),
                      pl.BlockSpec((Cp, Pp), lambda g: (0, 0))],
            out_specs=(pl.BlockSpec((NB, Ho, Wo, Pp), lambda g: (g, 0, 0, 0)),
                       pl.BlockSpec((NB, Ho * Wo, Pp), lambda g: (g, 0, 0)),
                       pl.BlockSpec((1, 2, Pp), lambda g: (g, 0, 0))),
            scratch_shapes=[pltpu.VMEM((NB, S2, Hq, Wq, Cp), jnp.bfloat16)]),
        compiler_params=cparams,
    )(xq, scale1, shift1, w1, wsc)

    g2 = jnp.pad(params["bn2_gamma"], (0, Pp - planes)).astype(jnp.float32)
    b2 = jnp.pad(params["bn2_beta"], (0, Pp - planes)).astype(jnp.float32)
    scale2, shift2 = _bn_scale_shift(st2, g2, b2, N * Ho * Wo)

    # ---- fused bn2+relu -> conv2(3x3, stride 1) + residual add ----
    kernel2 = functools.partial(_conv2_kernel, Ho=Ho, Wo=Wo)
    out = pl.pallas_call(
        kernel2,
        out_shape=jax.ShapeDtypeStruct((N, Ho, Wo, Pp), jnp.float32),
        grid_spec=pltpu.PrefetchScalarGridSpec(
            num_scalar_prefetch=0, grid=(G,),
            in_specs=[pl.BlockSpec((NB, Ho, Wo, Pp), lambda g: (g, 0, 0, 0)),
                      pl.BlockSpec((1, Pp), lambda g: (0, 0)),
                      pl.BlockSpec((1, Pp), lambda g: (0, 0)),
                      pl.BlockSpec((9, Pp, Pp), lambda g: (0, 0, 0)),
                      pl.BlockSpec((NB, Ho * Wo, Pp), lambda g: (g, 0, 0))],
            out_specs=pl.BlockSpec((NB, Ho, Wo, Pp), lambda g: (g, 0, 0, 0)),
            scratch_shapes=[pltpu.VMEM((NB, 1, Ho + 2, Wo + 2, Pp),
                                       jnp.bfloat16)]),
        compiler_params=cparams,
    )(out1, scale2, shift2, w2, sc2d)

    out = out[..., :planes]
    return jnp.transpose(out, (0, 3, 1, 2))                # back to NCHW


# ---------------------------- pure-JAX reference -----------------------------

def _conv_ref(x_nhwc, w_oihw, stride, pad):
    w = jnp.transpose(w_oihw, (2, 3, 1, 0))
    return lax.conv_general_dilated(
        x_nhwc, w, window_strides=(stride, stride),
        padding=((pad, pad), (pad, pad)),
        dimension_numbers=("NHWC", "HWIO", "NHWC"))


def _bn_relu_ref(x_nhwc, gamma, beta):
    mean = jnp.mean(x_nhwc, axis=(0, 1, 2))
    var = jnp.mean((x_nhwc - mean) ** 2, axis=(0, 1, 2))
    return jnp.maximum((x_nhwc - mean) / jnp.sqrt(var + EPS) * gamma + beta, 0.0)


def preact_block_ref(x_nchw, params, stride):
    x = jnp.transpose(x_nchw, (0, 2, 3, 1)).astype(jnp.float32)
    planes = params["conv1_w"].shape[0]
    h = _bn_relu_ref(x, params["bn1_gamma"], params["bn1_beta"])
    if stride != 1 or x.shape[-1] != planes:
        sc = _conv_ref(h, params["sc_w"], stride, 0)
    else:
        sc = h
    o = _conv_ref(h, params["conv1_w"], stride, 1)
    o = _bn_relu_ref(o, params["bn2_gamma"], params["bn2_beta"])
    o = _conv_ref(o, params["conv2_w"], 1, 1) + sc
    return jnp.transpose(o, (0, 3, 1, 2))


# ----------------------------------- main ------------------------------------

def init_params(key, in_planes, planes):
    k1, k2, k3 = jax.random.split(key, 3)
    std_w = 2.0 ** 0.5
    # Conv2dPrior default scaling_fn: std_w / in_channels**0.5
    return {
        "bn1_gamma": jnp.ones((in_planes,), jnp.float32),
        "bn1_beta": jnp.zeros((in_planes,), jnp.float32),
        "bn2_gamma": jnp.ones((planes,), jnp.float32),
        "bn2_beta": jnp.zeros((planes,), jnp.float32),
        "conv1_w": (std_w / in_planes ** 0.5) *
                   jax.random.normal(k1, (planes, in_planes, 3, 3), jnp.float32),
        "conv2_w": (std_w / planes ** 0.5) *
                   jax.random.normal(k2, (planes, planes, 3, 3), jnp.float32),
        "sc_w": (std_w / in_planes ** 0.5) *
                jax.random.normal(k3, (planes, in_planes, 1, 1), jnp.float32),
    }


if __name__ == "__main__":
    in_planes, planes, stride = 4, 8, 2
    key = jax.random.PRNGKey(0)
    kx, kp = jax.random.split(key)
    x = jax.random.normal(kx, (2, in_planes, 16, 16), jnp.float32)   # NCHW input
    params = init_params(kp, in_planes, planes)

    out = jax.block_until_ready(preact_block_forward(x, params, stride))
    ref = jax.block_until_ready(preact_block_ref(x, params, stride))

    assert out.shape == ref.shape == (2, planes, 8, 8)
    # bf16 MXU operands + bf16 HBM intermediates with f32 accumulation ->
    # compare against the f32 reference at bf16-level tolerance.
    np.testing.assert_allclose(np.asarray(out), np.asarray(ref),
                               rtol=3e-2, atol=6e-2)
    print("KERNEL_OK")
</pallas_src>

<mosaic_0001>
module attributes {stable_mosaic.version = 11 : i64} {
  func.func @_bn_stats_kernel(%arg0: i32, %arg1: memref<2x4x9x9x128xf32, #tpu.memory_space<vmem>>, %arg2: memref<1x2x128xf32, #tpu.memory_space<vmem>>) attributes {dimension_semantics = [#tpu.dimension_semantics<parallel>], iteration_bounds = array<i64: 1>, scalar_prefetch = 0 : i64, scratch_operands = 0 : i64, tpu.core_type = #tpu.core_type<tc>, window_params = [{transform_indices = @transform_0, window_bounds = array<i64: 2, 4, 9, 9, 128>}, {transform_indices = @transform_1, window_bounds = array<i64: 1, 2, 128>}]} {
    %c0 = arith.constant 0 : index
    %c0_0 = arith.constant 0 : index
    %c0_1 = arith.constant 0 : index
    %c0_2 = arith.constant 0 : index
    %c0_3 = arith.constant 0 : index
    %0 = vector.load %arg1[%c0, %c0_0, %c0_1, %c0_2, %c0_3] : memref<2x4x9x9x128xf32, #tpu.memory_space<vmem>>, vector<2x4x9x9x128xf32>
    %1 = arith.mulf %0, %0 : vector<2x4x9x9x128xf32>
    %cst = arith.constant dense<0.000000e+00> : vector<4x9x9x128xf32>
    %2 = vector.multi_reduction <add>, %0, %cst [0] : vector<2x4x9x9x128xf32> to vector<4x9x9x128xf32>
    %cst_4 = arith.constant dense<0.000000e+00> : vector<4x9x9x128xf32>
    %3 = vector.multi_reduction <add>, %1, %cst_4 [0] : vector<2x4x9x9x128xf32> to vector<4x9x9x128xf32>
    %cst_5 = arith.constant dense<0.000000e+00> : vector<9x9x128xf32>
    %4 = vector.multi_reduction <add>, %2, %cst_5 [0] : vector<4x9x9x128xf32> to vector<9x9x128xf32>
    %cst_6 = arith.constant dense<0.000000e+00> : vector<9x9x128xf32>
    %5 = vector.multi_reduction <add>, %3, %cst_6 [0] : vector<4x9x9x128xf32> to vector<9x9x128xf32>
    %cst_7 = arith.constant dense<0.000000e+00> : vector<9x128xf32>
    %6 = vector.multi_reduction <add>, %4, %cst_7 [0] : vector<9x9x128xf32> to vector<9x128xf32>
    %cst_8 = arith.constant dense<0.000000e+00> : vector<9x128xf32>
    %7 = vector.multi_reduction <add>, %5, %cst_8 [0] : vector<9x9x128xf32> to vector<9x128xf32>
    %cst_9 = arith.constant dense<0.000000e+00> : vector<128xf32>
    %8 = vector.multi_reduction <add>, %6, %cst_9 [0] : vector<9x128xf32> to vector<128xf32>
    %9 = vector.shape_cast %8 : vector<128xf32> to vector<1x128xf32>
    %c0_10 = arith.constant 0 : index
    %c0_11 = arith.constant 0 : index
    %c0_12 = arith.constant 0 : index
    %10 = vector.load %arg2[%c0_10, %c0_11, %c0_12] : memref<1x2x128xf32, #tpu.memory_space<vmem>>, vector<1x1x128xf32>
    %11 = vector.shape_cast %10 : vector<1x1x128xf32> to vector<1x128xf32>
    %12 = vector.shape_cast %9 : vector<1x128xf32> to vector<1x1x128xf32>
    tpu.vector_store %arg2[%c0_10, %c0_11, %c0_12], %12 {strides = array<i32>} : memref<1x2x128xf32, #tpu.memory_space<vmem>>, vector<1x1x128xf32>,
    %cst_13 = arith.constant dense<0.000000e+00> : vector<128xf32>
    %13 = vector.multi_reduction <add>, %7, %cst_13 [0] : vector<9x128xf32> to vector<128xf32>
    %14 = vector.shape_cast %13 : vector<128xf32> to vector<1x128xf32>
    %c0_14 = arith.constant 0 : index
    %c1 = arith.constant 1 : index
    %c0_15 = arith.constant 0 : index
    %15 = vector.load %arg2[%c0_14, %c1, %c0_15] : memref<1x2x128xf32, #tpu.memory_space<vmem>>, vector<1x1x128xf32>
    %16 = vector.shape_cast %15 : vector<1x1x128xf32> to vector<1x128xf32>
    %17 = vector.shape_cast %14 : vector<1x128xf32> to vector<1x1x128xf32>
    tpu.vector_store %arg2[%c0_14, %c1, %c0_15], %17 {strides = array<i32>} : memref<1x2x128xf32, #tpu.memory_space<vmem>>, vector<1x1x128xf32>,
    return
  }
  func.func @transform_0(%arg0: i32) -> (i32, i32, i32, i32, i32) {
    %c0_i32 = arith.constant 0 : i32
    %c0_i32_0 = arith.constant 0 : i32
    %c0_i32_1 = arith.constant 0 : i32
    %c0_i32_2 = arith.constant 0 : i32
    %c0_i32_3 = arith.constant 0 : i32
    return %arg0, %c0_i32, %c0_i32_0, %c0_i32_1, %c0_i32_2 : i32, i32, i32, i32, i32
  }
  func.func @transform_1(%arg0: i32) -> (i32, i32, i32) {
    %c0_i32 = arith.constant 0 : i32
    %c0_i32_0 = arith.constant 0 : i32
    %c0_i32_1 = arith.constant 0 : i32
    return %arg0, %c0_i32, %c0_i32_0 : i32, i32, i32
  }
}

</mosaic_0001>

<llo_original>
// kernel: tpu_custom_call.1
$region0: #{tpu_custom_call.1}
  #allocation0 [shape = 'u32[]', space=smem, size = 0x4, offset = 0x4, fixed_abs, tag = 'smem constant byte address 0x4 - core index']
  #allocation1 [shape = 'u32[144,128]{1,0:T(1,128)}', space=vmem, size = 0x12000, scoped, tag = 'internal scratch']
  %s0 = inlined_call_operand.vmem [shape: f32[2,4,9,9,128], index: 0, kind: input, shape index: {}]
  %s1 = inlined_call_operand.hbm [shape: f32[1,2,128], index: 1, kind: output, shape index: {}]
  %s2 = sld [smem:[#allocation0]]
  $region14: #{tpu_custom_call.1} parent=0
    _
  %s4 = ssub.s32 1, %s2
  %s5 = scalar_select 0, %s4, %s2
  $region1: #{tpu_custom_call.1} parent=0
    #allocation2 [shape = 'u8[1024]{0}', space=vmem, size = 0x400, scoped, tag = 'output window, operand 0, single buffered']
    #allocation3 [shape = 's32[1]{0}', space=sflag, size = 0x4, scoped, tag = 'scoped memory for tpu_custom_call.1']
    %6 = vsyncpa [#allocation3], 0
    // Predicated region
    $region2: #{tpu_custom_call.1} parent=1 // pred_check
      _
    $region3: #{tpu_custom_call.1} parent=1 // pred_check_branch
      %8 = sbr.rel (0) target = $region5
    $region4: #{tpu_custom_call.1} parent=1 // pred_region
      _
    $region5: #{tpu_custom_call.1} parent=1 // pred_fallthru
      _
    %v9 = vld [vmem:[%s0] sm:$0xff]
    %v10 = vld [vmem:[%s0 + $0x8] sm:$0x1]
    %v11 = vld [vmem:[%s0 + $0x10] sm:$0xff]
    %v12 = vld [vmem:[%s0 + $0x18] sm:$0x1]
    %v13 = vld [vmem:[%s0 + $0x20] sm:$0xff]
    %v14 = vld [vmem:[%s0 + $0x28] sm:$0x1]
    %v15 = vld [vmem:[%s0 + $0x30] sm:$0xff]
    %v16 = vld [vmem:[%s0 + $0x38] sm:$0x1]
    %v17 = vld [vmem:[%s0 + $0x40] sm:$0xff]
    %v18 = vld [vmem:[%s0 + $0x48] sm:$0x1]
    %v19 = vld [vmem:[%s0 + $0x50] sm:$0xff]
    %v20 = vld [vmem:[%s0 + $0x58] sm:$0x1]
    %v21 = vld [vmem:[%s0 + $0x60] sm:$0xff]
    %v22 = vld [vmem:[%s0 + $0x68] sm:$0x1]
    %v23 = vld [vmem:[%s0 + $0x70] sm:$0xff]
    %v24 = vld [vmem:[%s0 + $0x78] sm:$0x1]
    %v25 = vld [vmem:[%s0 + $0x80] sm:$0xff]
    %v26 = vld [vmem:[%s0 + $0x88] sm:$0x1]
    %v27 = vld [vmem:[%s0 + $0x90] sm:$0xff]
    %v28 = vld [vmem:[%s0 + $0x98] sm:$0x1]
    %v29 = vld [vmem:[%s0 + $0xa0] sm:$0xff]
    %v30 = vld [vmem:[%s0 + $0xa8] sm:$0x1]
    %v31 = vld [vmem:[%s0 + $0xb0] sm:$0xff]
    %v32 = vld [vmem:[%s0 + $0xb8] sm:$0x1]
    %v33 = vld [vmem:[%s0 + $0xc0] sm:$0xff]
    %v34 = vld [vmem:[%s0 + $0xc8] sm:$0x1]
    %v35 = vld [vmem:[%s0 + $0xd0] sm:$0xff]
    %v36 = vld [vmem:[%s0 + $0xd8] sm:$0x1]
    %v37 = vld [vmem:[%s0 + $0xe0] sm:$0xff]
    %v38 = vld [vmem:[%s0 + $0xe8] sm:$0x1]
    %v39 = vld [vmem:[%s0 + $0xf0] sm:$0xff]
    %v40 = vld [vmem:[%s0 + $0xf8] sm:$0x1]
    %v41 = vld [vmem:[%s0 + $0x100] sm:$0xff]
    %v42 = vld [vmem:[%s0 + $0x108] sm:$0x1]
    %v43 = vld [vmem:[%s0 + $0x110] sm:$0xff]
    %v44 = vld [vmem:[%s0 + $0x118] sm:$0x1]
    %v45 = vld [vmem:[%s0 + $0x120] sm:$0xff]
    %v46 = vld [vmem:[%s0 + $0x128] sm:$0x1]
    %v47 = vld [vmem:[%s0 + $0x130] sm:$0xff]
    %v48 = vld [vmem:[%s0 + $0x138] sm:$0x1]
    %v49 = vld [vmem:[%s0 + $0x140] sm:$0xff]
    %v50 = vld [vmem:[%s0 + $0x148] sm:$0x1]
    %v51 = vld [vmem:[%s0 + $0x150] sm:$0xff]
    %v52 = vld [vmem:[%s0 + $0x158] sm:$0x1]
    %v53 = vld [vmem:[%s0 + $0x160] sm:$0xff]
    %v54 = vld [vmem:[%s0 + $0x168] sm:$0x1]
    %v55 = vld [vmem:[%s0 + $0x170] sm:$0xff]
    %v56 = vld [vmem:[%s0 + $0x178] sm:$0x1]
    %v57 = vld [vmem:[%s0 + $0x180] sm:$0xff]
    %v58 = vld [vmem:[%s0 + $0x188] sm:$0x1]
    %v59 = vld [vmem:[%s0 + $0x190] sm:$0xff]
    %v60 = vld [vmem:[%s0 + $0x198] sm:$0x1]
    %v61 = vld [vmem:[%s0 + $0x1a0] sm:$0xff]
    %v62 = vld [vmem:[%s0 + $0x1a8] sm:$0x1]
    %v63 = vld [vmem:[%s0 + $0x1b0] sm:$0xff]
    %v64 = vld [vmem:[%s0 + $0x1b8] sm:$0x1]
    %v65 = vld [vmem:[%s0 + $0x1c0] sm:$0xff]
    %v66 = vld [vmem:[%s0 + $0x1c8] sm:$0x1]
    %v67 = vld [vmem:[%s0 + $0x1d0] sm:$0xff]
    %v68 = vld [vmem:[%s0 + $0x1d8] sm:$0x1]
    %v69 = vld [vmem:[%s0 + $0x1e0] sm:$0xff]
    %v70 = vld [vmem:[%s0 + $0x1e8] sm:$0x1]
    %v71 = vld [vmem:[%s0 + $0x1f0] sm:$0xff]
    %v72 = vld [vmem:[%s0 + $0x1f8] sm:$0x1]
    %v73 = vld [vmem:[%s0 + $0x200] sm:$0xff]
    %v74 = vld [vmem:[%s0 + $0x208] sm:$0x1]
    %v75 = vld [vmem:[%s0 + $0x210] sm:$0xff]
    %v76 = vld [vmem:[%s0 + $0x218] sm:$0x1]
    %v77 = vld [vmem:[%s0 + $0x220] sm:$0xff]
    %v78 = vld [vmem:[%s0 + $0x228] sm:$0x1]
    %v79 = vld [vmem:[%s0 + $0x230] sm:$0xff]
    %v80 = vld [vmem:[%s0 + $0x238] sm:$0x1]
    %v81 = vld [vmem:[%s0 + $0x240] sm:$0xff]
    %v82 = vld [vmem:[%s0 + $0x248] sm:$0x1]
    %v83 = vld [vmem:[%s0 + $0x250] sm:$0xff]
    %v84 = vld [vmem:[%s0 + $0x258] sm:$0x1]
    %v85 = vld [vmem:[%s0 + $0x260] sm:$0xff]
    %v86 = vld [vmem:[%s0 + $0x268] sm:$0x1]
    %v87 = vld [vmem:[%s0 + $0x270] sm:$0xff]
    %v88 = vld [vmem:[%s0 + $0x278] sm:$0x1]
    %v89 = vld [vmem:[%s0 + $0x280] sm:$0xff]
    %v90 = vld [vmem:[%s0 + $0x288] sm:$0x1]
    %v91 = vld [vmem:[%s0 + $0x290] sm:$0xff]
    %v92 = vld [vmem:[%s0 + $0x298] sm:$0x1]
    %v93 = vld [vmem:[%s0 + $0x2a0] sm:$0xff]
    %v94 = vld [vmem:[%s0 + $0x2a8] sm:$0x1]
    %v95 = vld [vmem:[%s0 + $0x2b0] sm:$0xff]
    %v96 = vld [vmem:[%s0 + $0x2b8] sm:$0x1]
    %v97 = vld [vmem:[%s0 + $0x2c0] sm:$0xff]
    %v98 = vld [vmem:[%s0 + $0x2c8] sm:$0x1]
    %v99 = vld [vmem:[%s0 + $0x2d0] sm:$0xff]
    %v100 = vld [vmem:[%s0 + $0x2d8] sm:$0x1]
    %v101 = vld [vmem:[%s0 + $0x2e0] sm:$0xff]
    %v102 = vld [vmem:[%s0 + $0x2e8] sm:$0x1]
    %v103 = vld [vmem:[%s0 + $0x2f0] sm:$0xff]
    %v104 = vld [vmem:[%s0 + $0x2f8] sm:$0x1]
    %v105 = vld [vmem:[%s0 + $0x300] sm:$0xff]
    %v106 = vld [vmem:[%s0 + $0x308] sm:$0x1]
    %v107 = vld [vmem:[%s0 + $0x310] sm:$0xff]
    %v108 = vld [vmem:[%s0 + $0x318] sm:$0x1]
    %v109 = vld [vmem:[%s0 + $0x320] sm:$0xff]
    %v110 = vld [vmem:[%s0 + $0x328] sm:$0x1]
    %v111 = vld [vmem:[%s0 + $0x330] sm:$0xff]
    %v112 = vld [vmem:[%s0 + $0x338] sm:$0x1]
    %v113 = vld [vmem:[%s0 + $0x340] sm:$0xff]
    %v114 = vld [vmem:[%s0 + $0x348] sm:$0x1]
    %v115 = vld [vmem:[%s0 + $0x350] sm:$0xff]
    %v116 = vld [vmem:[%s0 + $0x358] sm:$0x1]
    %v117 = vld [vmem:[%s0 + $0x360] sm:$0xff]
    %v118 = vld [vmem:[%s0 + $0x368] sm:$0x1]
    %v119 = vld [vmem:[%s0 + $0x370] sm:$0xff]
    %v120 = vld [vmem:[%s0 + $0x378] sm:$0x1]
    %v121 = vld [vmem:[%s0 + $0x380] sm:$0xff]
    %v122 = vld [vmem:[%s0 + $0x388] sm:$0x1]
    %v123 = vld [vmem:[%s0 + $0x390] sm:$0xff]
    %v124 = vld [vmem:[%s0 + $0x398] sm:$0x1]
    %v125 = vld [vmem:[%s0 + $0x3a0] sm:$0xff]
    %v126 = vld [vmem:[%s0 + $0x3a8] sm:$0x1]
    %v127 = vld [vmem:[%s0 + $0x3b0] sm:$0xff]
    %v128 = vld [vmem:[%s0 + $0x3b8] sm:$0x1]
    %v129 = vld [vmem:[%s0 + $0x3c0] sm:$0xff]
    %v130 = vld [vmem:[%s0 + $0x3c8] sm:$0x1]
    %v131 = vld [vmem:[%s0 + $0x3d0] sm:$0xff]
    %v132 = vld [vmem:[%s0 + $0x3d8] sm:$0x1]
    %v133 = vld [vmem:[%s0 + $0x3e0] sm:$0xff]
    %v134 = vld [vmem:[%s0 + $0x3e8] sm:$0x1]
    %v135 = vld [vmem:[%s0 + $0x3f0] sm:$0xff]
    %v136 = vld [vmem:[%s0 + $0x3f8] sm:$0x1]
    %v137 = vld [vmem:[%s0 + $0x400] sm:$0xff]
    %v138 = vld [vmem:[%s0 + $0x408] sm:$0x1]
    %v139 = vld [vmem:[%s0 + $0x410] sm:$0xff]
    %v140 = vld [vmem:[%s0 + $0x418] sm:$0x1]
    %v141 = vld [vmem:[%s0 + $0x420] sm:$0xff]
    %v142 = vld [vmem:[%s0 + $0x428] sm:$0x1]
    %v143 = vld [vmem:[%s0 + $0x430] sm:$0xff]
    %v144 = vld [vmem:[%s0 + $0x438] sm:$0x1]
    %v145 = vld [vmem:[%s0 + $0x440] sm:$0xff]
    %v146 = vld [vmem:[%s0 + $0x448] sm:$0x1]
    %v147 = vld [vmem:[%s0 + $0x450] sm:$0xff]
    %v148 = vld [vmem:[%s0 + $0x458] sm:$0x1]
    %v149 = vld [vmem:[%s0 + $0x460] sm:$0xff]
    %v150 = vld [vmem:[%s0 + $0x468] sm:$0x1]
    %v151 = vld [vmem:[%s0 + $0x470] sm:$0xff]
    %v152 = vld [vmem:[%s0 + $0x478] sm:$0x1]
    %v153 = vmul.f32 %v9, %v9
    %v154 = vmul.f32 %v10, %v10
    %v155 = vmul.f32 %v11, %v11
    %v156 = vmul.f32 %v12, %v12
    %v157 = vmul.f32 %v13, %v13
    %v158 = vmul.f32 %v14, %v14
    %v159 = vmul.f32 %v15, %v15
    %v160 = vmul.f32 %v16, %v16
    %v161 = vmul.f32 %v17, %v17
    %v162 = vmul.f32 %v18, %v18
    %v163 = vmul.f32 %v19, %v19
    %v164 = vmul.f32 %v20, %v20
    %v165 = vmul.f32 %v21, %v21
    %v166 = vmul.f32 %v22, %v22
    %v167 = vmul.f32 %v23, %v23
    %v168 = vmul.f32 %v24, %v24
    %v169 = vmul.f32 %v25, %v25
    %v170 = vmul.f32 %v26, %v26
    %v171 = vmul.f32 %v27, %v27
    %v172 = vmul.f32 %v28, %v28
    %v173 = vmul.f32 %v29, %v29
    %v174 = vmul.f32 %v30, %v30
    %v175 = vmul.f32 %v31, %v31
    %v176 = vmul.f32 %v32, %v32
    %v177 = vmul.f32 %v33, %v33
    %v178 = vmul.f32 %v34, %v34
    %v179 = vmul.f32 %v35, %v35
    %v180 = vmul.f32 %v36, %v36
    %v181 = vmul.f32 %v37, %v37
    %v182 = vmul.f32 %v38, %v38
    %v183 = vmul.f32 %v39, %v39
    %v184 = vmul.f32 %v40, %v40
    %v185 = vmul.f32 %v41, %v41
    %v186 = vmul.f32 %v42, %v42
    %v187 = vmul.f32 %v43, %v43
    %v188 = vmul.f32 %v44, %v44
    %v189 = vmul.f32 %v45, %v45
    %v190 = vmul.f32 %v46, %v46
    %v191 = vmul.f32 %v47, %v47
    %v192 = vmul.f32 %v48, %v48
    %v193 = vmul.f32 %v49, %v49
    %v194 = vmul.f32 %v50, %v50
    %v195 = vmul.f32 %v51, %v51
    %v196 = vmul.f32 %v52, %v52
    %v197 = vmul.f32 %v53, %v53
    %v198 = vmul.f32 %v54, %v54
    %v199 = vmul.f32 %v55, %v55
    %v200 = vmul.f32 %v56, %v56
    %v201 = vmul.f32 %v57, %v57
    %v202 = vmul.f32 %v58, %v58
    %v203 = vmul.f32 %v59, %v59
    %v204 = vmul.f32 %v60, %v60
    %v205 = vmul.f32 %v61, %v61
    %v206 = vmul.f32 %v62, %v62
    %v207 = vmul.f32 %v63, %v63
    %v208 = vmul.f32 %v64, %v64
    %v209 = vmul.f32 %v65, %v65
    %v210 = vmul.f32 %v66, %v66
    %v211 = vmul.f32 %v67, %v67
    %v212 = vmul.f32 %v68, %v68
    %v213 = vmul.f32 %v69, %v69
    %v214 = vmul.f32 %v70, %v70
    %v215 = vmul.f32 %v71, %v71
    %v216 = vmul.f32 %v72, %v72
    %v217 = vmul.f32 %v73, %v73
    %v218 = vmul.f32 %v74, %v74
    %v219 = vmul.f32 %v75, %v75
    %v220 = vmul.f32 %v76, %v76
    %v221 = vmul.f32 %v77, %v77
    %v222 = vmul.f32 %v78, %v78
    %v223 = vmul.f32 %v79, %v79
    %v224 = vmul.f32 %v80, %v80
    %v225 = vmul.f32 %v81, %v81
    %v226 = vmul.f32 %v82, %v82
    %v227 = vmul.f32 %v83, %v83
    %v228 = vmul.f32 %v84, %v84
    %v229 = vmul.f32 %v85, %v85
    %v230 = vmul.f32 %v86, %v86
    %v231 = vmul.f32 %v87, %v87
    %v232 = vmul.f32 %v88, %v88
    %v233 = vmul.f32 %v89, %v89
    %v234 = vmul.f32 %v90, %v90
    %v235 = vmul.f32 %v91, %v91
    %v236 = vmul.f32 %v92, %v92
    %v237 = vmul.f32 %v93, %v93
    %v238 = vmul.f32 %v94, %v94
    %v239 = vmul.f32 %v95, %v95
    %v240 = vmul.f32 %v96, %v96
    %v241 = vmul.f32 %v97, %v97
    %v242 = vmul.f32 %v98, %v98
    %v243 = vmul.f32 %v99, %v99
    %v244 = vmul.f32 %v100, %v100
    %v245 = vmul.f32 %v101, %v101
    %v246 = vmul.f32 %v102, %v102
    %v247 = vmul.f32 %v103, %v103
    %v248 = vmul.f32 %v104, %v104
    %v249 = vmul.f32 %v105, %v105
    %v250 = vmul.f32 %v106, %v106
    %v251 = vmul.f32 %v107, %v107
    %v252 = vmul.f32 %v108, %v108
    %v253 = vmul.f32 %v109, %v109
    %v254 = vmul.f32 %v110, %v110
    %v255 = vmul.f32 %v111, %v111
    %v256 = vmul.f32 %v112, %v112
    %v257 = vmul.f32 %v113, %v113
    %v258 = vmul.f32 %v114, %v114
    %v259 = vmul.f32 %v115, %v115
    %v260 = vmul.f32 %v116, %v116
    %v261 = vmul.f32 %v117, %v117
    %v262 = vmul.f32 %v118, %v118
    %v263 = vmul.f32 %v119, %v119
    %v264 = vmul.f32 %v120, %v120
    %v265 = vmul.f32 %v121, %v121
    %v266 = vmul.f32 %v122, %v122
    %v267 = vmul.f32 %v123, %v123
    %v268 = vmul.f32 %v124, %v124
    %v269 = vmul.f32 %v125, %v125
    %v270 = vmul.f32 %v126, %v126
    %v271 = vmul.f32 %v127, %v127
    %v272 = vmul.f32 %v128, %v128
    %v273 = vmul.f32 %v129, %v129
    %v274 = vmul.f32 %v130, %v130
    %v275 = vmul.f32 %v131, %v131
    %v276 = vmul.f32 %v132, %v132
    %v277 = vmul.f32 %v133, %v133
    %v278 = vmul.f32 %v134, %v134
    %v279 = vmul.f32 %v135, %v135
    %v280 = vmul.f32 %v136, %v136
    %v281 = vmul.f32 %v137, %v137
    %v282 = vmul.f32 %v138, %v138
    %v283 = vmul.f32 %v139, %v139
    %v284 = vmul.f32 %v140, %v140
    %v285 = vmul.f32 %v141, %v141
    %v286 = vmul.f32 %v142, %v142
    %v287 = vmul.f32 %v143, %v143
    %v288 = vmul.f32 %v144, %v144
    %v289 = vmul.f32 %v145, %v145
    %v290 = vmul.f32 %v146, %v146
    %v291 = vmul.f32 %v147, %v147
    %v292 = vmul.f32 %v148, %v148
    %v293 = vmul.f32 %v149, %v149
    %v294 = vmul.f32 %v150, %v150
    %v295 = vmul.f32 %v151, %v151
    %v296 = vmul.f32 %v152, %v152
    %v297 = vadd.f32 %v9, %v81
    %vm298 = vcmask 1040384
    %v299 = vsel %vm298, %v10, 0.0
    %v300 = vsel %vm298, %v82, 0.0
    %v301 = vadd.f32 %v299, %v300
    %v302 = vadd.f32 %v11, %v83
    %v303 = vsel %vm298, %v12, 0.0
    %v304 = vsel %vm298, %v84, 0.0
    %v305 = vadd.f32 %v303, %v304
    %v306 = vadd.f32 %v13, %v85
    %v307 = vsel %vm298, %v14, 0.0
    %v308 = vsel %vm298, %v86, 0.0
    %v309 = vadd.f32 %v307, %v308
    %v310 = vadd.f32 %v15, %v87
    %v311 = vsel %vm298, %v16, 0.0
    %v312 = vsel %vm298, %v88, 0.0
    %v313 = vadd.f32 %v311, %v312
    %v314 = vadd.f32 %v17, %v89
    %v315 = vsel %vm298, %v18, 0.0
    %v316 = vsel %vm298, %v90, 0.0
    %v317 = vadd.f32 %v315, %v316
    %v318 = vadd.f32 %v19, %v91
    %v319 = vsel %vm298, %v20, 0.0
    %v320 = vsel %vm298, %v92, 0.0
    %v321 = vadd.f32 %v319, %v320
    %v322 = vadd.f32 %v21, %v93
    %v323 = vsel %vm298, %v22, 0.0
    %v324 = vsel %vm298, %v94, 0.0
    %v325 = vadd.f32 %v323, %v324
    %v326 = vadd.f32 %v23, %v95
    %v327 = vsel %vm298, %v24, 0.0
    %v328 = vsel %vm298, %v96, 0.0
    %v329 = vadd.f32 %v327, %v328
    %v330 = vadd.f32 %v25, %v97
    %v331 = vsel %vm298, %v26, 0.0
    %v332 = vsel %vm298, %v98, 0.0
    %v333 = vadd.f32 %v331, %v332
    %v334 = vadd.f32 %v27, %v99
    %v335 = vsel %vm298, %v28, 0.0
    %v336 = vsel %vm298, %v100, 0.0
    %v337 = vadd.f32 %v335, %v336
    %v338 = vadd.f32 %v29, %v101
    %v339 = vsel %vm298, %v30, 0.0
    %v340 = vsel %vm298, %v102, 0.0
    %v341 = vadd.f32 %v339, %v340
    %v342 = vadd.f32 %v31, %v103
    %v343 = vsel %vm298, %v32, 0.0
    %v344 = vsel %vm298, %v104, 0.0
    %v345 = vadd.f32 %v343, %v344
    %v346 = vadd.f32 %v33, %v105
    %v347 = vsel %vm298, %v34, 0.0
    %v348 = vsel %vm298, %v106, 0.0
    %v349 = vadd.f32 %v347, %v348
    %v350 = vadd.f32 %v35, %v107
    %v351 = vsel %vm298, %v36, 0.0
    %v352 = vsel %vm298, %v108, 0.0
    %v353 = vadd.f32 %v351, %v352
    %v354 = vadd.f32 %v37, %v109
    %v355 = vsel %vm298, %v38, 0.0
    %v356 = vsel %vm298, %v110, 0.0
    %v357 = vadd.f32 %v355, %v356
    %v358 = vadd.f32 %v39, %v111
    %v359 = vsel %vm298, %v40, 0.0
    %v360 = vsel %vm298, %v112, 0.0
    %v361 = vadd.f32 %v359, %v360
    %v362 = vadd.f32 %v41, %v113
    %v363 = vsel %vm298, %v42, 0.0
    %v364 = vsel %vm298, %v114, 0.0
    %v365 = vadd.f32 %v363, %v364
    %v366 = vadd.f32 %v43, %v115
    %v367 = vsel %vm298, %v44, 0.0
    %v368 = vsel %vm298, %v116, 0.0
    %v369 = vadd.f32 %v367, %v368
    %v370 = vadd.f32 %v45, %v117
    %v371 = vsel %vm298, %v46, 0.0
    %v372 = vsel %vm298, %v118, 0.0
    %v373 = vadd.f32 %v371, %v372
    %v374 = vadd.f32 %v47, %v119
    %v375 = vsel %vm298, %v48, 0.0
    %v376 = vsel %vm298, %v120, 0.0
    %v377 = vadd.f32 %v375, %v376
    %v378 = vadd.f32 %v49, %v121
    %v379 = vsel %vm298, %v50, 0.0
    %v380 = vsel %vm298, %v122, 0.0
    %v381 = vadd.f32 %v379, %v380
    %v382 = vadd.f32 %v51, %v123
    %v383 = vsel %vm298, %v52, 0.0
    %v384 = vsel %vm298, %v124, 0.0
    %v385 = vadd.f32 %v383, %v384
    %v386 = vadd.f32 %v53, %v125
    %v387 = vsel %vm298, %v54, 0.0
    %v388 = vsel %vm298, %v126, 0.0
    %v389 = vadd.f32 %v387, %v388
    %v390 = vadd.f32 %v55, %v127
    %v391 = vsel %vm298, %v56, 0.0
    %v392 = vsel %vm298, %v128, 0.0
    %v393 = vadd.f32 %v391, %v392
    %v394 = vadd.f32 %v57, %v129
    %v395 = vsel %vm298, %v58, 0.0
    %v396 = vsel %vm298, %v130, 0.0
    %v397 = vadd.f32 %v395, %v396
    %v398 = vadd.f32 %v59, %v131
    %v399 = vsel %vm298, %v60, 0.0
    %v400 = vsel %vm298, %v132, 0.0
    %v401 = vadd.f32 %v399, %v400
    %v402 = vadd.f32 %v61, %v133
    %v403 = vsel %vm298, %v62, 0.0
    %v404 = vsel %vm298, %v134, 0.0
    %v405 = vadd.f32 %v403, %v404
    %v406 = vadd.f32 %v63, %v135
    %v407 = vsel %vm298, %v64, 0.0
    %v408 = vsel %vm298, %v136, 0.0
    %v409 = vadd.f32 %v407, %v408
    %v410 = vadd.f32 %v65, %v137
    %v411 = vsel %vm298, %v66, 0.0
    %v412 = vsel %vm298, %v138, 0.0
    %v413 = vadd.f32 %v411, %v412
    %v414 = vadd.f32 %v67, %v139
    %v415 = vsel %vm298, %v68, 0.0
    %v416 = vsel %vm298, %v140, 0.0
    %v417 = vadd.f32 %v415, %v416
    %v418 = vadd.f32 %v69, %v141
    %v419 = vsel %vm298, %v70, 0.0
    %v420 = vsel %vm298, %v142, 0.0
    %v421 = vadd.f32 %v419, %v420
    %v422 = vadd.f32 %v71, %v143
    %v423 = vsel %vm298, %v72, 0.0
    %v424 = vsel %vm298, %v144, 0.0
    %v425 = vadd.f32 %v423, %v424
    %v426 = vadd.f32 %v73, %v145
    %v427 = vsel %vm298, %v74, 0.0
    %v428 = vsel %vm298, %v146, 0.0
    %v429 = vadd.f32 %v427, %v428
    %v430 = vadd.f32 %v75, %v147
    %v431 = vsel %vm298, %v76, 0.0
    %v432 = vsel %vm298, %v148, 0.0
    %v433 = vadd.f32 %v431, %v432
    %v434 = vadd.f32 %v77, %v149
    %v435 = vsel %vm298, %v78, 0.0
    %v436 = vsel %vm298, %v150, 0.0
    %v437 = vadd.f32 %v435, %v436
    %v438 = vadd.f32 %v79, %v151
    %v439 = vsel %vm298, %v80, 0.0
    %v440 = vsel %vm298, %v152, 0.0
    %v441 = vadd.f32 %v439, %v440
    %v442 = vadd.f32 %v153, %v225
    %v443 = vsel %vm298, %v154, 0.0
    %v444 = vsel %vm298, %v226, 0.0
    %v445 = vadd.f32 %v443, %v444
    %v446 = vadd.f32 %v155, %v227
    %v447 = vsel %vm298, %v156, 0.0
    %v448 = vsel %vm298, %v228, 0.0
    %v449 = vadd.f32 %v447, %v448
    %v450 = vadd.f32 %v157, %v229
    %v451 = vsel %vm298, %v158, 0.0
    %v452 = vsel %vm298, %v230, 0.0
    %v453 = vadd.f32 %v451, %v452
    %v454 = vadd.f32 %v159, %v231
    %v455 = vsel %vm298, %v160, 0.0
    %v456 = vsel %vm298, %v232, 0.0
    %v457 = vadd.f32 %v455, %v456
    %v458 = vadd.f32 %v161, %v233
    %v459 = vsel %vm298, %v162, 0.0
    %v460 = vsel %vm298, %v234, 0.0
    %v461 = vadd.f32 %v459, %v460
    %v462 = vadd.f32 %v163, %v235
    %v463 = vsel %vm298, %v164, 0.0
    %v464 = vsel %vm298, %v236, 0.0
    %v465 = vadd.f32 %v463, %v464
    %v466 = vadd.f32 %v165, %v237
    %v467 = vsel %vm298, %v166, 0.0
    %v468 = vsel %vm298, %v238, 0.0
    %v469 = vadd.f32 %v467, %v468
    %v470 = vadd.f32 %v167, %v239
    %v471 = vsel %vm298, %v168, 0.0
    %v472 = vsel %vm298, %v240, 0.0
    %v473 = vadd.f32 %v471, %v472
    %v474 = vadd.f32 %v169, %v241
    %v475 = vsel %vm298, %v170, 0.0
    %v476 = vsel %vm298, %v242, 0.0
    %v477 = vadd.f32 %v475, %v476
    %v478 = vadd.f32 %v171, %v243
    %v479 = vsel %vm298, %v172, 0.0
    %v480 = vsel %vm298, %v244, 0.0
    %v481 = vadd.f32 %v479, %v480
    %v482 = vadd.f32 %v173, %v245
    %v483 = vsel %vm298, %v174, 0.0
    %v484 = vsel %vm298, %v246, 0.0
    %v485 = vadd.f32 %v483, %v484
    %v486 = vadd.f32 %v175, %v247
    %v487 = vsel %vm298, %v176, 0.0
    %v488 = vsel %vm298, %v248, 0.0
    %v489 = vadd.f32 %v487, %v488
    %v490 = vadd.f32 %v177, %v249
    %v491 = vsel %vm298, %v178, 0.0
    %v492 = vsel %vm298, %v250, 0.0
    %v493 = vadd.f32 %v491, %v492
    %v494 = vadd.f32 %v179, %v251
    %v495 = vsel %vm298, %v180, 0.0
    %v496 = vsel %vm298, %v252, 0.0
    %v497 = vadd.f32 %v495, %v496
    %v498 = vadd.f32 %v181, %v253
    %v499 = vsel %vm298, %v182, 0.0
    %v500 = vsel %vm298, %v254, 0.0
    %v501 = vadd.f32 %v499, %v500
    %v502 = vadd.f32 %v183, %v255
    %v503 = vsel %vm298, %v184, 0.0
    %v504 = vsel %vm298, %v256, 0.0
    %v505 = vadd.f32 %v503, %v504
    %v506 = vadd.f32 %v185, %v257
    %v507 = vsel %vm298, %v186, 0.0
    %v508 = vsel %vm298, %v258, 0.0
    %v509 = vadd.f32 %v507, %v508
    %v510 = vadd.f32 %v187, %v259
    %v511 = vsel %vm298, %v188, 0.0
    %v512 = vsel %vm298, %v260, 0.0
    %v513 = vadd.f32 %v511, %v512
    %v514 = vadd.f32 %v189, %v261
    %v515 = vsel %vm298, %v190, 0.0
    %v516 = vsel %vm298, %v262, 0.0
    %v517 = vadd.f32 %v515, %v516
    %v518 = vadd.f32 %v191, %v263
    %v519 = vsel %vm298, %v192, 0.0
    %v520 = vsel %vm298, %v264, 0.0
    %v521 = vadd.f32 %v519, %v520
    %v522 = vadd.f32 %v193, %v265
    %v523 = vsel %vm298, %v194, 0.0
    %v524 = vsel %vm298, %v266, 0.0
    %v525 = vadd.f32 %v523, %v524
    %v526 = vadd.f32 %v195, %v267
    %v527 = vsel %vm298, %v196, 0.0
    %v528 = vsel %vm298, %v268, 0.0
    %v529 = vadd.f32 %v527, %v528
    %v530 = vadd.f32 %v197, %v269
    %v531 = vsel %vm298, %v198, 0.0
    %v532 = vsel %vm298, %v270, 0.0
    %v533 = vadd.f32 %v531, %v532
    %v534 = vadd.f32 %v199, %v271
    %v535 = vsel %vm298, %v200, 0.0
    %v536 = vsel %vm298, %v272, 0.0
    %v537 = vadd.f32 %v535, %v536
    %v538 = vadd.f32 %v201, %v273
    %v539 = vsel %vm298, %v202, 0.0
    %v540 = vsel %vm298, %v274, 0.0
    %v541 = vadd.f32 %v539, %v540
    %v542 = vadd.f32 %v203, %v275
    %v543 = vsel %vm298, %v204, 0.0
    %v544 = vsel %vm298, %v276, 0.0
    %v545 = vadd.f32 %v543, %v544
    %v546 = vadd.f32 %v205, %v277
    %v547 = vsel %vm298, %v206, 0.0
    %v548 = vsel %vm298, %v278, 0.0
    %v549 = vadd.f32 %v547, %v548
    %v550 = vadd.f32 %v207, %v279
    %v551 = vsel %vm298, %v208, 0.0
    %v552 = vsel %vm298, %v280, 0.0
    %v553 = vadd.f32 %v551, %v552
    %v554 = vadd.f32 %v209, %v281
    %v555 = vsel %vm298, %v210, 0.0
    %v556 = vsel %vm298, %v282, 0.0
    %v557 = vadd.f32 %v555, %v556
    %v558 = vadd.f32 %v211, %v283
    %v559 = vsel %vm298, %v212, 0.0
    %v560 = vsel %vm298, %v284, 0.0
    %v561 = vadd.f32 %v559, %v560
    %v562 = vadd.f32 %v213, %v285
    %v563 = vsel %vm298, %v214, 0.0
    %v564 = vsel %vm298, %v286, 0.0
    %v565 = vadd.f32 %v563, %v564
    %v566 = vadd.f32 %v215, %v287
    %v567 = vsel %vm298, %v216, 0.0
    %v568 = vsel %vm298, %v288, 0.0
    %v569 = vadd.f32 %v567, %v568
    %v570 = vadd.f32 %v217, %v289
    %v571 = vsel %vm298, %v218, 0.0
    %v572 = vsel %vm298, %v290, 0.0
    %v573 = vadd.f32 %v571, %v572
    %v574 = vadd.f32 %v219, %v291
    %v575 = vsel %vm298, %v220, 0.0
    %v576 = vsel %vm298, %v292, 0.0
    %v577 = vadd.f32 %v575, %v576
    %v578 = vadd.f32 %v221, %v293
    %v579 = vsel %vm298, %v222, 0.0
    %v580 = vsel %vm298, %v294, 0.0
    %v581 = vadd.f32 %v579, %v580
    %v582 = vadd.f32 %v223, %v295
    %v583 = vsel %vm298, %v224, 0.0
    %v584 = vsel %vm298, %v296, 0.0
    %v585 = vadd.f32 %v583, %v584
    %v586 = vadd.f32 %v297, %v334
    %v587 = vadd.f32 %v586, %v370
    %v588 = vadd.f32 %v587, %v406
    %v589 = vsel %vm298, %v301, 0.0
    %v590 = vsel %vm298, %v337, 0.0
    %v591 = vadd.f32 %v589, %v590
    %v592 = vsel %vm298, %v373, 0.0
    %v593 = vadd.f32 %v591, %v592
    %v594 = vsel %vm298, %v409, 0.0
    %v595 = vadd.f32 %v593, %v594
    %v596 = vadd.f32 %v302, %v338
    %v597 = vadd.f32 %v596, %v374
    %v598 = vadd.f32 %v597, %v410
    %v599 = vsel %vm298, %v305, 0.0
    %v600 = vsel %vm298, %v341, 0.0
    %v601 = vadd.f32 %v599, %v600
    %v602 = vsel %vm298, %v377, 0.0
    %v603 = vadd.f32 %v601, %v602
    %v604 = vsel %vm298, %v413, 0.0
    %v605 = vadd.f32 %v603, %v604
    %v606 = vadd.f32 %v306, %v342
    %v607 = vadd.f32 %v606, %v378
    %v608 = vadd.f32 %v607, %v414
    %v609 = vsel %vm298, %v309, 0.0
    %v610 = vsel %vm298, %v345, 0.0
    %v611 = vadd.f32 %v609, %v610
    %v612 = vsel %vm298, %v381, 0.0
    %v613 = vadd.f32 %v611, %v612
    %v614 = vsel %vm298, %v417, 0.0
    %v615 = vadd.f32 %v613, %v614
    %v616 = vadd.f32 %v310, %v346
    %v617 = vadd.f32 %v616, %v382
    %v618 = vadd.f32 %v617, %v418
    %v619 = vsel %vm298, %v313, 0.0
    %v620 = vsel %vm298, %v349, 0.0
    %v621 = vadd.f32 %v619, %v620
    %v622 = vsel %vm298, %v385, 0.0
    %v623 = vadd.f32 %v621, %v622
    %v624 = vsel %vm298, %v421, 0.0
    %v625 = vadd.f32 %v623, %v624
    %v626 = vadd.f32 %v314, %v350
    %v627 = vadd.f32 %v626, %v386
    %v628 = vadd.f32 %v627, %v422
    %v629 = vsel %vm298, %v317, 0.0
    %v630 = vsel %vm298, %v353, 0.0
    %v631 = vadd.f32 %v629, %v630
    %v632 = vsel %vm298, %v389, 0.0
    %v633 = vadd.f32 %v631, %v632
    %v634 = vsel %vm298, %v425, 0.0
    %v635 = vadd.f32 %v633, %v634
    %v636 = vadd.f32 %v318, %v354
    %v637 = vadd.f32 %v636, %v390
    %v638 = vadd.f32 %v637, %v426
    %v639 = vsel %vm298, %v321, 0.0
    %v640 = vsel %vm298, %v357, 0.0
    %v641 = vadd.f32 %v639, %v640
    %v642 = vsel %vm298, %v393, 0.0
    %v643 = vadd.f32 %v641, %v642
    %v644 = vsel %vm298, %v429, 0.0
    %v645 = vadd.f32 %v643, %v644
    %v646 = vadd.f32 %v322, %v358
    %v647 = vadd.f32 %v646, %v394
    %v648 = vadd.f32 %v647, %v430
    %v649 = vsel %vm298, %v325, 0.0
    %v650 = vsel %vm298, %v361, 0.0
    %v651 = vadd.f32 %v649, %v650
    %v652 = vsel %vm298, %v397, 0.0
    %v653 = vadd.f32 %v651, %v652
    %v654 = vsel %vm298, %v433, 0.0
    %v655 = vadd.f32 %v653, %v654
    %v656 = vadd.f32 %v326, %v362
    %v657 = vadd.f32 %v656, %v398
    %v658 = vadd.f32 %v657, %v434
    %v659 = vsel %vm298, %v329, 0.0
    %v660 = vsel %vm298, %v365, 0.0
    %v661 = vadd.f32 %v659, %v660
    %v662 = vsel %vm298, %v401, 0.0
    %v663 = vadd.f32 %v661, %v662
    %v664 = vsel %vm298, %v437, 0.0
    %v665 = vadd.f32 %v663, %v664
    %v666 = vadd.f32 %v330, %v366
    %v667 = vadd.f32 %v666, %v402
    %v668 = vadd.f32 %v667, %v438
    %v669 = vsel %vm298, %v333, 0.0
    %v670 = vsel %vm298, %v369, 0.0
    %v671 = vadd.f32 %v669, %v670
    %v672 = vsel %vm298, %v405, 0.0
    %v673 = vadd.f32 %v671, %v672
    %v674 = vsel %vm298, %v441, 0.0
    %v675 = vadd.f32 %v673, %v674
    %v676 = vadd.f32 %v442, %v478
    %v677 = vadd.f32 %v676, %v514
    %v678 = vadd.f32 %v677, %v550
    %v679 = vsel %vm298, %v445, 0.0
    %v680 = vsel %vm298, %v481, 0.0
    %v681 = vadd.f32 %v679, %v680
    %v682 = vsel %vm298, %v517, 0.0
    %v683 = vadd.f32 %v681, %v682
    %v684 = vsel %vm298, %v553, 0.0
    %v685 = vadd.f32 %v683, %v684
    %v686 = vadd.f32 %v446, %v482
    %v687 = vadd.f32 %v686, %v518
    %v688 = vadd.f32 %v687, %v554
    %v689 = vsel %vm298, %v449, 0.0
    %v690 = vsel %vm298, %v485, 0.0
    %v691 = vadd.f32 %v689, %v690
    %v692 = vsel %vm298, %v521, 0.0
    %v693 = vadd.f32 %v691, %v692
    %v694 = vsel %vm298, %v557, 0.0
    %v695 = vadd.f32 %v693, %v694
    %v696 = vadd.f32 %v450, %v486
    %v697 = vadd.f32 %v696, %v522
    %v698 = vadd.f32 %v697, %v558
    %v699 = vsel %vm298, %v453, 0.0
    %v700 = vsel %vm298, %v489, 0.0
    %v701 = vadd.f32 %v699, %v700
    %v702 = vsel %vm298, %v525, 0.0
    %v703 = vadd.f32 %v701, %v702
    %v704 = vsel %vm298, %v561, 0.0
    %v705 = vadd.f32 %v703, %v704
    %v706 = vadd.f32 %v454, %v490
    %v707 = vadd.f32 %v706, %v526
    %v708 = vadd.f32 %v707, %v562
    %v709 = vsel %vm298, %v457, 0.0
    %v710 = vsel %vm298, %v493, 0.0
    %v711 = vadd.f32 %v709, %v710
    %v712 = vsel %vm298, %v529, 0.0
    %v713 = vadd.f32 %v711, %v712
    %v714 = vsel %vm298, %v565, 0.0
    %v715 = vadd.f32 %v713, %v714
    %v716 = vadd.f32 %v458, %v494
    %v717 = vadd.f32 %v716, %v530
    %v718 = vadd.f32 %v717, %v566
    %v719 = vsel %vm298, %v461, 0.0
    %v720 = vsel %vm298, %v497, 0.0
    %v721 = vadd.f32 %v719, %v720
    %v722 = vsel %vm298, %v533, 0.0
    %v723 = vadd.f32 %v721, %v722
    %v724 = vsel %vm298, %v569, 0.0
    %v725 = vadd.f32 %v723, %v724
    %v726 = vadd.f32 %v462, %v498
    %v727 = vadd.f32 %v726, %v534
    %v728 = vadd.f32 %v727, %v570
    %v729 = vsel %vm298, %v465, 0.0
    %v730 = vsel %vm298, %v501, 0.0
    %v731 = vadd.f32 %v729, %v730
    %v732 = vsel %vm298, %v537, 0.0
    %v733 = vadd.f32 %v731, %v732
    %v734 = vsel %vm298, %v573, 0.0
    %v735 = vadd.f32 %v733, %v734
    %v736 = vadd.f32 %v466, %v502
    %v737 = vadd.f32 %v736, %v538
    %v738 = vadd.f32 %v737, %v574
    %v739 = vsel %vm298, %v469, 0.0
    %v740 = vsel %vm298, %v505, 0.0
    %v741 = vadd.f32 %v739, %v740
    %v742 = vsel %vm298, %v541, 0.0
    %v743 = vadd.f32 %v741, %v742
    %v744 = vsel %vm298, %v577, 0.0
    %v745 = vadd.f32 %v743, %v744
    %v746 = vadd.f32 %v470, %v506
    %v747 = vadd.f32 %v746, %v542
    %v748 = vadd.f32 %v747, %v578
    %v749 = vsel %vm298, %v473, 0.0
    %v750 = vsel %vm298, %v509, 0.0
    %v751 = vadd.f32 %v749, %v750
    %v752 = vsel %vm298, %v545, 0.0
    %v753 = vadd.f32 %v751, %v752
    %v754 = vsel %vm298, %v581, 0.0
    %v755 = vadd.f32 %v753, %v754
    %v756 = vadd.f32 %v474, %v510
    %v757 = vadd.f32 %v756, %v546
    %v758 = vadd.f32 %v757, %v582
    %v759 = vsel %vm298, %v477, 0.0
    %v760 = vsel %vm298, %v513, 0.0
    %v761 = vadd.f32 %v759, %v760
    %v762 = vsel %vm298, %v549, 0.0
    %v763 = vadd.f32 %v761, %v762
    %v764 = vsel %vm298, %v585, 0.0
    %v765 = vadd.f32 %v763, %v764
    %v766 = vadd.f32 %v588, %v598
    %v767 = vadd.f32 %v766, %v608
    %v768 = vadd.f32 %v767, %v618
    %v769 = vadd.f32 %v768, %v628
    %v770 = vadd.f32 %v769, %v638
    %v771 = vadd.f32 %v770, %v648
    %v772 = vadd.f32 %v771, %v658
    %v773 = vadd.f32 %v772, %v668
    %v774 = vsel %vm298, %v595, 0.0
    %v775 = vsel %vm298, %v605, 0.0
    %v776 = vadd.f32 %v774, %v775
    %v777 = vsel %vm298, %v615, 0.0
    %v778 = vadd.f32 %v776, %v777
    %v779 = vsel %vm298, %v625, 0.0
    %v780 = vadd.f32 %v778, %v779
    %v781 = vsel %vm298, %v635, 0.0
    %v782 = vadd.f32 %v780, %v781
    %v783 = vsel %vm298, %v645, 0.0
    %v784 = vadd.f32 %v782, %v783
    %v785 = vsel %vm298, %v655, 0.0
    %v786 = vadd.f32 %v784, %v785
    %v787 = vsel %vm298, %v665, 0.0
    %v788 = vadd.f32 %v786, %v787
    %v789 = vsel %vm298, %v675, 0.0
    %v790 = vadd.f32 %v788, %v789
    %v791 = vadd.f32 %v678, %v688
    %v792 = vadd.f32 %v791, %v698
    %v793 = vadd.f32 %v792, %v708
    %v794 = vadd.f32 %v793, %v718
    %v795 = vadd.f32 %v794, %v728
    %v796 = vadd.f32 %v795, %v738
    %v797 = vadd.f32 %v796, %v748
    %v798 = vadd.f32 %v797, %v758
    %v799 = vsel %vm298, %v685, 0.0
    %v800 = vsel %vm298, %v695, 0.0
    %v801 = vadd.f32 %v799, %v800
    %v802 = vsel %vm298, %v705, 0.0
    %v803 = vadd.f32 %v801, %v802
    %v804 = vsel %vm298, %v715, 0.0
    %v805 = vadd.f32 %v803, %v804
    %v806 = vsel %vm298, %v725, 0.0
    %v807 = vadd.f32 %v805, %v806
    %v808 = vsel %vm298, %v735, 0.0
    %v809 = vadd.f32 %v807, %v808
    %v810 = vsel %vm298, %v745, 0.0
    %v811 = vadd.f32 %v809, %v810
    %v812 = vsel %vm298, %v755, 0.0
    %v813 = vadd.f32 %v811, %v812
    %v814 = vsel %vm298, %v765, 0.0
    %v815 = vadd.f32 %v813, %v814
    %v816 = vsel %vm298, %v790, 0.0
    %v817 = vadd.f32 %v773, %v816
    %v818 = vrot.slane %v817, 4
    %v819 = vadd.f32 %v817, %v818
    %v820 = vrot.slane %v819, 2
    %v821 = vadd.f32 %v819, %v820
    %v822 = vrot.slane %v821, 1
    %v823 = vadd.f32 %v821, %v822
    %824 = vst [vmem:[#allocation2] sm:$0x1] %v823
    %v825 = vsel %vm298, %v815, 0.0
    %v826 = vadd.f32 %v798, %v825
    %v827 = vrot.slane %v826, 4
    %v828 = vadd.f32 %v826, %v827
    %v829 = vrot.slane %v828, 2
    %v830 = vadd.f32 %v828, %v829
    %v831 = vrot.slane %v830, 1
    %v832 = vadd.f32 %v830, %v831
    %833 = vst [vmem:[#allocation2 + $0x1] sm:$0x1] %v832
    // Predicated region
    $region6: #{tpu_custom_call.1} parent=1 // pred_check
      _
    $region7: #{tpu_custom_call.1} parent=1 // pred_check_branch
      %835 = sbr.rel (0) target = $region9
    $region8: #{tpu_custom_call.1} parent=1 // pred_region
      %s837 = ssub.s32 32, 32
      %838 = vsyncadd [#allocation3], %s837
      %s840 = sshll.u32 [#allocation2], 4
      %s841 = int_to_ptr.vmem [resolvable:$true] %s840
      %843 = dma.vmem_to_hbm [thread:$0]  %s841, 32, %s1, [#allocation3]
    $region9: #{tpu_custom_call.1} parent=1 // pred_fallthru
      _
    // Predicated region
    $region10: #{tpu_custom_call.1} parent=1 // pred_check
      _
    $region11: #{tpu_custom_call.1} parent=1 // pred_check_branch
      %845 = sbr.rel (0) target = $region13
    $region12: #{tpu_custom_call.1} parent=1 // pred_region
      %846 = dma.done [#allocation3], 32
    $region13: #{tpu_custom_call.1} parent=1 // pred_fallthru
      _
    %847 = vsyncpa [#allocation3], 1

</llo_original>
